<compile_context>
chip_gen: v6e
topology: v6e:2x2x1
jax: 0.10.0
libtpu: 0.0.40
codegen_flags: <defaults>
</compile_context>

<pallas_src>
import functools

import jax
import jax.numpy as jnp
from jax.experimental import pallas as pl
from jax.experimental.pallas import tpu as pltpu

_LANE = 1024                 # lane-dense last dim (multiple of 128)
_MAX_TILE_ROWS = 1024        # 1024 x 1024 f32 = 4 MiB per tile
_TARGET_GRID_STEPS = 8       # keep several grid steps -> pipeline overlap + 2 TCs on v7x
_PALLAS_MIN_BYTES = 4 << 20  # below this, plain XLA fusion is strictly faster


def _round_up(x, m):
    return ((x + m - 1) // m) * m


def _add_scalar_kernel(b_ref, x_ref, o_ref):
    # b_ref: (1,) scalar in SMEM; x_ref / o_ref: (tm, _LANE) VMEM tiles.
    o_ref[...] = x_ref[...] + b_ref[0]


def _pallas_add_scalar_2d(x2d, b_scalar, *, donate_input=False):
    """out2d = x2d + b_scalar[0] for a (rows, _LANE) lane-dense array."""
    rows, lane = x2d.shape
    assert lane == _LANE

    if rows <= 8:
        # Tiny input: a single full-extent block (block dims == array dims).
        tm = rows
    else:
        # Aim for >= _TARGET_GRID_STEPS grid steps (pipelining + v7x megacore)
        # while capping the tile at 4 MiB; keep tm a multiple of 8 sublanes.
        tm = min(_MAX_TILE_ROWS,
                 max(8, _round_up(pl.cdiv(rows, _TARGET_GRID_STEPS), 8)))
    grid = (pl.cdiv(rows, tm),)

    # Only alias the output onto the input when the caller really donated the
    # input's buffer; otherwise XLA inserts a defensive copy (extra HBM pass).
    aliases = {1: 0} if donate_input else {}

    return pl.pallas_call(
        _add_scalar_kernel,
        out_shape=jax.ShapeDtypeStruct((rows, _LANE), x2d.dtype),
        grid=grid,
        in_specs=[
            pl.BlockSpec(memory_space=pltpu.MemorySpace.SMEM),  # scalar b
            pl.BlockSpec((tm, _LANE), lambda i: (i, 0)),         # x tiles
        ],
        out_specs=pl.BlockSpec((tm, _LANE), lambda i: (i, 0)),
        input_output_aliases=aliases,
        compiler_params=pltpu.CompilerParams(
            dimension_semantics=("parallel",)),
    )(b_scalar, x2d)


def _pallas_add_scalar(x, b_scalar, *, donate_input=False):
    """out = x + b_scalar[0] via a tiled lane-dense Pallas kernel.

    Multiples of _LANE elements: pure (free) reshape -> kernel -> reshape.
    Ragged sizes: bulk (rows * _LANE) through the kernel, the <_LANE-element
    tail through a plain XLA add. No jnp.pad / [:total] full-array passes.
    """
    orig_shape = x.shape
    total = x.size
    rows = total // _LANE
    tail = total - rows * _LANE

    if tail == 0:
        x2d = x.reshape(rows, _LANE)  # bitcast-free reshape
        out2d = _pallas_add_scalar_2d(x2d, b_scalar, donate_input=donate_input)
        return out2d.reshape(orig_shape)

    flat = x.reshape(-1)
    parts = []
    if rows > 0:
        bulk2d = flat[: rows * _LANE].reshape(rows, _LANE)
        parts.append(_pallas_add_scalar_2d(bulk2d, b_scalar).reshape(-1))
    parts.append(flat[rows * _LANE:] + b_scalar[0])  # tiny tail: XLA add
    return jnp.concatenate(parts).reshape(orig_shape)


def simple_net_forward(x, a, b, *, force_pallas=False, donate_input=False):
    """Reproduces simple_net.forward.

    x : f32[...]  activation
    a : f32[1]    (value 11.0)
    b : f32[1]    (value 2.0; overwritten by a, matching self.b.copy_(self.a))

    Returns (output, new_b) so the persistent parameter mutation is threaded
    functionally.
    """
    b_new = a  # self.b.copy_(self.a)
    # TODO(synk): torch's `print('forward')` side effect is intentionally omitted.

    small = (x.size * jnp.dtype(x.dtype).itemsize) < _PALLAS_MIN_BYTES
    if small and not force_pallas:
        # Tiny activations: fused XLA elementwise add beats a custom call.
        out = x + b_new[0]
    else:
        out = _pallas_add_scalar(x, b_new, donate_input=donate_input)
    return out, b_new


if __name__ == "__main__":
    key = jax.random.PRNGKey(0)
    x = jax.random.normal(key, (2, 4, 16, 16), dtype=jnp.float32)

    # Deterministic parameter init (from module __init__)
    a = jnp.array([11.0], dtype=jnp.float32)
    b = jnp.array([2.0], dtype=jnp.float32)

    # Force the Pallas path so the kernel itself is exercised even at this
    # tiny test shape (production use would take the XLA-fused fast path).
    fwd = jax.jit(functools.partial(simple_net_forward, force_pallas=True))
    out, b_new = fwd(x, a, b)
    out = jax.block_until_ready(out)

    expected = x + 11.0
    assert out.shape == x.shape and out.dtype == x.dtype
    assert jnp.allclose(out, expected, atol=1e-6), "mismatch vs reference"
    assert jnp.allclose(b_new, a), "parameter copy_ not reproduced"

    # Ragged-size correctness check (bulk kernel + XLA tail path, no padding).
    x2 = jax.random.normal(jax.random.PRNGKey(1), (3, 1051), dtype=jnp.float32)
    out2, _ = fwd(x2, a, b)
    out2 = jax.block_until_ready(out2)
    assert jnp.allclose(out2, x2 + 11.0, atol=1e-6), "ragged-path mismatch"

    print("KERNEL_OK")
</pallas_src>

<mosaic_0001>
module attributes {stable_mosaic.version = 11 : i64} {
  func.func @_add_scalar_kernel(%arg0: i32, %arg1: memref<1xf32, #tpu.memory_space<smem>>, %arg2: memref<2x1024xf32, #tpu.memory_space<vmem>>, %arg3: memref<2x1024xf32, #tpu.memory_space<vmem>>) attributes {dimension_semantics = [#tpu.dimension_semantics<parallel>], iteration_bounds = array<i64: 1>, scalar_prefetch = 0 : i64, scratch_operands = 0 : i64, tpu.core_type = #tpu.core_type<tc>, window_params = [{transform_indices = @transform_0, window_bounds = array<i64: 1>}, {transform_indices = @transform_1, window_bounds = array<i64: 2, 1024>}, {transform_indices = @transform_2, window_bounds = array<i64: 2, 1024>}]} {
    %c0 = arith.constant 0 : index
    %c0_0 = arith.constant 0 : index
    %0 = vector.load %arg2[%c0, %c0_0] : memref<2x1024xf32, #tpu.memory_space<vmem>>, vector<2x1024xf32>
    %c0_1 = arith.constant 0 : index
    %1 = memref.load %arg1[%c0_1] : memref<1xf32, #tpu.memory_space<smem>>
    %2 = vector.broadcast %1 : f32 to vector<2x1024xf32>
    %3 = arith.addf %0, %2 : vector<2x1024xf32>
    %c0_2 = arith.constant 0 : index
    %c0_3 = arith.constant 0 : index
    %4 = vector.load %arg3[%c0_2, %c0_3] : memref<2x1024xf32, #tpu.memory_space<vmem>>, vector<2x1024xf32>
    tpu.vector_store %arg3[%c0_2, %c0_3], %3 {strides = array<i32>} : memref<2x1024xf32, #tpu.memory_space<vmem>>, vector<2x1024xf32>,
    return
  }
  func.func @transform_0(%arg0: i32) -> i32 {
    %c0_i32 = arith.constant 0 : i32
    %c0_i32_0 = arith.constant 0 : i32
    return %c0_i32 : i32
  }
  func.func @transform_1(%arg0: i32) -> (i32, i32) {
    %c0_i32 = arith.constant 0 : i32
    %c0_i32_0 = arith.constant 0 : i32
    return %arg0, %c0_i32 : i32, i32
  }
  func.func @transform_2(%arg0: i32) -> (i32, i32) {
    %c0_i32 = arith.constant 0 : i32
    %c0_i32_0 = arith.constant 0 : i32
    return %arg0, %c0_i32 : i32, i32
  }
}

</mosaic_0001>

<llo_original>
// kernel: simple_net_forward.1
$region0: #{simple_net_forward.1}
  #allocation0 [shape = 'u32[]', space=smem, size = 0x4, offset = 0x4, fixed_abs, tag = 'smem constant byte address 0x4 - core index']
  #allocation1 [shape = 'u32[144,128]{1,0:T(1,128)}', space=vmem, size = 0x12000, scoped, tag = 'internal scratch']
  #allocation2 [shape = 'f32[1]{0:T(128)S(6)}', space=smem, size = 0x200, scoped, tag = 'scoped memory for simple_net_forward.1']
  %s0 = inlined_call_operand.<no memory space> [shape: f32[1], index: 0, kind: input, shape index: {}]
  %s1 = inlined_call_operand.vmem [shape: f32[2,1024], index: 1, kind: input, shape index: {}]
  %s2 = inlined_call_operand.vmem [shape: f32[2,1024], index: 2, kind: output, shape index: {}]
  %s3 = sld [smem:[#allocation0]]
  $region18: #{simple_net_forward.1} parent=0
    _
  %s5 = ssub.s32 1, %s3
  %s6 = scalar_select 0, %s5, %s3
  %7 = sst [smem:[#allocation2]] %s0
  // Predicated region
  $region2: #{simple_net_forward.1} parent=0 // pred_check
    _
  $region3: #{simple_net_forward.1} parent=0 // pred_check_branch
    %9 = sbr.rel (0) target = $region5
  $region4: #{simple_net_forward.1} parent=0 // pred_region
    _
  $region5: #{simple_net_forward.1} parent=0 // pred_fallthru
    _
  // Predicated region
  $region6: #{simple_net_forward.1} parent=0 // pred_check
    _
  $region7: #{simple_net_forward.1} parent=0 // pred_check_branch
    %11 = sbr.rel (0) target = $region9
  $region8: #{simple_net_forward.1} parent=0 // pred_region
    _
  $region9: #{simple_net_forward.1} parent=0 // pred_fallthru
    _
  %v12 = vld [vmem:[%s1] sm:$0xff]
  %v13 = vld [vmem:[%s1 + $0x8] sm:$0xff]
  %s14 = sld [smem:[#allocation2]]
  %v15 = vstv %s14
  %v16 = vadd.f32 %v12, %v15
  %v17 = vadd.f32 %v13, %v15
  %18 = vst [vmem:[%s2] sm:$0xff] %v16
  %19 = vst [vmem:[%s2 + $0x8] sm:$0xff] %v17
  // Predicated region
  $region10: #{simple_net_forward.1} parent=0 // pred_check
    _
  $region11: #{simple_net_forward.1} parent=0 // pred_check_branch
    %21 = sbr.rel (0) target = $region13
  $region12: #{simple_net_forward.1} parent=0 // pred_region
    _
  $region13: #{simple_net_forward.1} parent=0 // pred_fallthru
    _
  // Predicated region
  $region14: #{simple_net_forward.1} parent=0 // pred_check
    _
  $region15: #{simple_net_forward.1} parent=0 // pred_check_branch
    %23 = sbr.rel (0) target = $region17
  $region16: #{simple_net_forward.1} parent=0 // pred_region
    _
  $region17: #{simple_net_forward.1} parent=0 // pred_fallthru
    _

</llo_original>
